<compile_context>
chip_gen: v5e
topology: v5e:2x2
jax: 0.10.0
libtpu: 0.0.40
codegen_flags: <defaults>
</compile_context>

<pallas_src>
import jax
import jax.numpy as jnp
from jax.experimental import pallas as pl
from jax.experimental.pallas import tpu as pltpu

_LANE = 128
_SUBLANE = 8


def _round_up(n, m):
    return ((n + m - 1) // m) * m


def _logreg_kernel(x_ref, w_ref, b_ref, o_ref):
    # x_ref: (TB, F) VMEM   w_ref: (1, F) VMEM   b_ref: (1, 1) SMEM
    # o_ref: (1, 1, TB) VMEM (batch on the lane axis -> lane-dense store)
    x = x_ref[...]
    w = w_ref[...]                              # lane-dense row, broadcast over TB
    F = x.shape[-1]

    if F > _LANE:
        # Chunked VPU accumulation: keep a single (TB, 128) live partial and do
        # exactly one cross-lane (XLU) reduce at the end. Cuts XLU work ~F/128x
        # and shrinks vreg pressure vs. materializing the full (TB, F) product.
        n_full = F // _LANE
        acc = x[:, 0:_LANE] * w[:, 0:_LANE]
        for k in range(1, n_full):              # static, tile-aligned slices
            lo = k * _LANE
            acc = acc + x[:, lo:lo + _LANE] * w[:, lo:lo + _LANE]
        z = jnp.sum(acc, axis=-1)
        if F - n_full * _LANE:                  # ragged tail chunk (< 128 lanes)
            lo = n_full * _LANE
            z = z + jnp.sum(x[:, lo:] * w[:, lo:], axis=-1)
    else:
        z = jnp.sum(x * w, axis=-1)             # VPU multiply + one XLU lane reduce

    z = z + b_ref[0, 0]                         # scalar bias from SMEM
    y = jax.nn.sigmoid(z)                       # exp / recip on the EUP
    o_ref[...] = y.reshape(o_ref.shape).astype(o_ref.dtype)


def logistic_model(x, weight, bias, *, target_tile_bytes=4 << 20):
    """sigmoid(x @ weight.T + bias) — PyTorch nn.Linear(F, 1) followed by sigmoid.

    x:      (B, F) float32
    weight: (1, F) float32  (PyTorch nn.Linear weight layout)
    bias:   (1,)   float32
    returns (B, 1) float32
    """
    B, F = x.shape
    assert weight.shape == (1, F) and bias.shape == (1,)

    # --- Byte-budgeted batch tile (accounting for lane padding of F) --------
    F_lanes = _round_up(F, _LANE)               # actual VMEM row width
    row_bytes = 4 * F_lanes
    TB = max(_LANE, (target_tile_bytes // row_bytes) // _LANE * _LANE)
    TB = min(TB, _round_up(B, _LANE))           # don't exceed the (padded) batch
    # Keep >= 2 tiles when the batch allows, so the "parallel" grid axis can
    # shard across both TensorCores on v7x.
    if B > _LANE and pl.cdiv(B, TB) < 2:
        TB = max(_LANE, _round_up(pl.cdiv(B, 2), _LANE))
    num_tiles = pl.cdiv(B, TB)                  # no jnp.pad: ragged tail handled by Pallas

    b2 = bias.reshape(1, 1)                     # scalar bias -> SMEM

    # Scoped-VMEM budget: lane/sublane-padded, double-buffered footprint + headroom.
    vmem_bytes = (2 * TB * F_lanes * 4          # x tiles (double-buffered)
                  + 2 * _SUBLANE * F_lanes * 4  # weight row
                  + 2 * _SUBLANE * TB * 4)      # output slab
    vmem_limit = int(min(48 << 20, max(16 << 20, vmem_bytes + (4 << 20))))

    out = pl.pallas_call(
        _logreg_kernel,
        out_shape=jax.ShapeDtypeStruct((num_tiles, 1, TB), x.dtype),
        grid=(num_tiles,),
        in_specs=[
            pl.BlockSpec((TB, F), lambda i: (i, 0)),      # x tile, pipelined DMA
            pl.BlockSpec((1, F), lambda i: (0, 0)),       # weight row, same block each step
            pl.BlockSpec(memory_space=pltpu.SMEM),        # bias scalar in SMEM
        ],
        out_specs=pl.BlockSpec((1, 1, TB), lambda i: (i, 0, 0)),  # lane-dense output
        compiler_params=pltpu.CompilerParams(
            dimension_semantics=("parallel",),
            vmem_limit_bytes=vmem_limit,
        ),
        cost_estimate=pl.CostEstimate(
            flops=2 * B * F,
            transcendentals=B,
            bytes_accessed=4 * (B * F + F + 1 + B),
        ),
    )(x, weight, b2)

    # Tile-major flatten: valid rows occupy exactly [0, B); any garbage rows of
    # the boundary (tail) tile sit at [B, num_tiles*TB) and are sliced off.
    return out.reshape(num_tiles * TB)[:B].reshape(B, 1)


if __name__ == "__main__":
    key = jax.random.PRNGKey(0)
    kx, kw, kb = jax.random.split(key, 3)

    batch = 8
    n_input_features = 32

    # Shapes from nn.Linear(n_input_features, 1): weight (1, F), bias (1,).
    x = jax.random.normal(kx, (batch, n_input_features), dtype=jnp.float32)
    w = jax.random.normal(kw, (1, n_input_features), dtype=jnp.float32) * 0.1
    b = jax.random.normal(kb, (1,), dtype=jnp.float32) * 0.1

    y = logistic_model(x, w, b)
    jax.block_until_ready(y)

    # Sanity check against plain JAX reference (also exercises the ragged-tail
    # boundary-block path, since batch < TB here).
    y_ref = jax.nn.sigmoid(x @ w.T + b)
    assert y.shape == (batch, 1)
    assert jnp.allclose(y, y_ref, atol=1e-5), "mismatch vs reference"

    print("KERNEL_OK")
</pallas_src>

<mosaic_0001>
module attributes {stable_mosaic.version = 11 : i64} {
  func.func @_logreg_kernel(%arg0: i32, %arg1: memref<128x32xf32, #tpu.memory_space<vmem>>, %arg2: memref<1x32xf32, #tpu.memory_space<vmem>>, %arg3: memref<1x1xf32, #tpu.memory_space<smem>>, %arg4: memref<1x1x128xf32, #tpu.memory_space<vmem>>) attributes {dimension_semantics = [#tpu.dimension_semantics<parallel>], iteration_bounds = array<i64: 1>, scalar_prefetch = 0 : i64, scratch_operands = 0 : i64, tpu.core_type = #tpu.core_type<tc>, window_params = [{transform_indices = @transform_0, window_bounds = array<i64: 128, 32>}, {pipeline_mode = #tpu.pipeline_mode<synchronous>, transform_indices = @transform_1, window_bounds = array<i64: 1, 32>}, {transform_indices = @transform_2, window_bounds = array<i64: 1, 1>}, {transform_indices = @transform_3, window_bounds = array<i64: 1, 1, 128>}]} {
    %c0 = arith.constant 0 : index
    %c0_0 = arith.constant 0 : index
    %0 = vector.load %arg1[%c0, %c0_0] : memref<128x32xf32, #tpu.memory_space<vmem>>, vector<128x32xf32>
    %c0_1 = arith.constant 0 : index
    %c0_2 = arith.constant 0 : index
    %1 = vector.load %arg2[%c0_1, %c0_2] : memref<1x32xf32, #tpu.memory_space<vmem>>, vector<1x32xf32>
    %2 = vector.broadcast %1 : vector<1x32xf32> to vector<128x32xf32>
    %3 = arith.mulf %0, %2 : vector<128x32xf32>
    %cst = arith.constant dense<0.000000e+00> : vector<128xf32>
    %4 = vector.multi_reduction <add>, %3, %cst [1] : vector<128x32xf32> to vector<128xf32>
    %c0_3 = arith.constant 0 : index
    %c0_4 = arith.constant 0 : index
    %5 = memref.load %arg3[%c0_3, %c0_4] : memref<1x1xf32, #tpu.memory_space<smem>>
    %6 = vector.broadcast %5 : f32 to vector<128xf32>
    %7 = arith.addf %4, %6 : vector<128xf32>
    %8 = arith.negf %7 : vector<128xf32>
    %9 = math.exp %8 : vector<128xf32>
    %cst_5 = arith.constant 1.000000e+00 : f32
    %10 = vector.broadcast %cst_5 : f32 to vector<128xf32>
    %11 = arith.addf %10, %9 : vector<128xf32>
    %12 = arith.divf %10, %11 : vector<128xf32>
    %13 = vector.shape_cast %12 : vector<128xf32> to vector<1x1x128xf32>
    %c0_6 = arith.constant 0 : index
    %c0_7 = arith.constant 0 : index
    %c0_8 = arith.constant 0 : index
    %14 = vector.load %arg4[%c0_6, %c0_7, %c0_8] : memref<1x1x128xf32, #tpu.memory_space<vmem>>, vector<1x1x128xf32>
    tpu.vector_store %arg4[%c0_6, %c0_7, %c0_8], %13 {strides = array<i32>} : memref<1x1x128xf32, #tpu.memory_space<vmem>>, vector<1x1x128xf32>,
    return
  }
  func.func @transform_0(%arg0: i32) -> (i32, i32) {
    %c0_i32 = arith.constant 0 : i32
    %c0_i32_0 = arith.constant 0 : i32
    return %arg0, %c0_i32 : i32, i32
  }
  func.func @transform_1(%arg0: i32) -> (i32, i32) {
    %c0_i32 = arith.constant 0 : i32
    %c0_i32_0 = arith.constant 0 : i32
    %c0_i32_1 = arith.constant 0 : i32
    return %c0_i32, %c0_i32_0 : i32, i32
  }
  func.func @transform_2(%arg0: i32) -> (i32, i32) {
    %c0_i32 = arith.constant 0 : i32
    %c0_i32_0 = arith.constant 0 : i32
    %c0_i32_1 = arith.constant 0 : i32
    return %c0_i32, %c0_i32_0 : i32, i32
  }
  func.func @transform_3(%arg0: i32) -> (i32, i32, i32) {
    %c0_i32 = arith.constant 0 : i32
    %c0_i32_0 = arith.constant 0 : i32
    %c0_i32_1 = arith.constant 0 : i32
    return %arg0, %c0_i32, %c0_i32_0 : i32, i32, i32
  }
}

</mosaic_0001>

<llo_original>
// kernel: tpu_custom_call.1
$region0: #{tpu_custom_call.1}
  #allocation0 [shape = 'u32[]', space=smem, size = 0x4, offset = 0x4, fixed_abs, tag = 'smem constant byte address 0x4 - core index']
  #allocation1 [shape = 'u32[72,128]{1,0:T(1,128)}', space=vmem, size = 0x9000, scoped, tag = 'internal scratch']
  #allocation2 [shape = 'f32[1,1]{1,0:T(1,128)S(6)}', space=smem, size = 0x200, scoped, tag = 'scoped memory for tpu_custom_call.1']
  %s0 = inlined_call_operand.hbm [shape: f32[8,32], index: 0, kind: input, shape index: {}]
  %s1 = inlined_call_operand.vmem [shape: f32[1,32], index: 1, kind: input, shape index: {}]
  %s2 = inlined_call_operand.<no memory space> [shape: f32[1,1], index: 2, kind: input, shape index: {}]
  %s3 = inlined_call_operand.hbm [shape: f32[1,1,128], index: 3, kind: output, shape index: {}]
  %s4 = sld [smem:[#allocation0]]
  $region26: #{tpu_custom_call.1} parent=0
    _
  %s6 = ssub.s32 1, %s4
  %s7 = scalar_select 0, %s6, %s4
  %8 = sst [smem:[#allocation2]] %s2
  $region1: #{tpu_custom_call.1} parent=0
    #allocation3 [shape = 'u8[65536]{0}', space=vmem, size = 0x10000, scoped, tag = 'input window, operand 0, single buffered']
    #allocation4 [shape = 's32[1]{0}', space=sflag, size = 0x4, scoped, tag = 'scoped memory for tpu_custom_call.1']
    #allocation5 [shape = 's32[1]{0}', space=sflag, size = 0x4, scoped, tag = 'scoped memory for tpu_custom_call.1']
    #allocation6 [shape = 'u8[512]{0}', space=vmem, size = 0x400, scoped, tag = 'output window, operand 0, single buffered']
    %9 = vsyncpa [#allocation4], 0
    %10 = vsyncpa [#allocation5], 0
    // Predicated region
    $region2: #{tpu_custom_call.1} parent=1 // pred_check
      _
    $region3: #{tpu_custom_call.1} parent=1 // pred_check_branch
      %12 = sbr.rel (0) target = $region5
    $region4: #{tpu_custom_call.1} parent=1 // pred_region
      %14 = vsyncadd [#allocation4], 1920
      %s15 = sshll.u32 %s0, 4
      %s16 = int_to_ptr.hbm [resolvable:$true] %s15
      %s17 = sshll.u32 [#allocation3], 4
      %s18 = int_to_ptr.vmem [resolvable:$true] %s17
      %23 = dma.hbm_to_vmem [thread:$0]  %s16, 128, %s18, [#allocation4], 128, 128, 8
    $region5: #{tpu_custom_call.1} parent=1 // pred_fallthru
      _
    // Predicated region
    $region6: #{tpu_custom_call.1} parent=1 // pred_check
      _
    $region7: #{tpu_custom_call.1} parent=1 // pred_check_branch
      %25 = sbr.rel (0) target = $region9
    $region8: #{tpu_custom_call.1} parent=1 // pred_region
      _
    $region9: #{tpu_custom_call.1} parent=1 // pred_fallthru
      _
    // Predicated region
    $region10: #{tpu_custom_call.1} parent=1 // pred_check
      _
    $region11: #{tpu_custom_call.1} parent=1 // pred_check_branch
      %27 = sbr.rel (0) target = $region13
    $region12: #{tpu_custom_call.1} parent=1 // pred_region
      _
    $region13: #{tpu_custom_call.1} parent=1 // pred_fallthru
      _
    // Predicated region
    $region14: #{tpu_custom_call.1} parent=1 // pred_check
      _
    $region15: #{tpu_custom_call.1} parent=1 // pred_check_branch
      %29 = sbr.rel (0) target = $region17
    $region16: #{tpu_custom_call.1} parent=1 // pred_region
      %31 = dma.done [#allocation4], 2048
    $region17: #{tpu_custom_call.1} parent=1 // pred_fallthru
      _
    %v32 = vld [vmem:[#allocation3] sm:$0xff]
    %v33 = vld [vmem:[#allocation3 + $0x8] sm:$0xff]
    %v34 = vld [vmem:[#allocation3 + $0x10] sm:$0xff]
    %v35 = vld [vmem:[#allocation3 + $0x18] sm:$0xff]
    %v36 = vld [vmem:[#allocation3 + $0x20] sm:$0xff]
    %v37 = vld [vmem:[#allocation3 + $0x28] sm:$0xff]
    %v38 = vld [vmem:[#allocation3 + $0x30] sm:$0xff]
    %v39 = vld [vmem:[#allocation3 + $0x38] sm:$0xff]
    %v40 = vld [vmem:[#allocation3 + $0x40] sm:$0xff]
    %v41 = vld [vmem:[#allocation3 + $0x48] sm:$0xff]
    %v42 = vld [vmem:[#allocation3 + $0x50] sm:$0xff]
    %v43 = vld [vmem:[#allocation3 + $0x58] sm:$0xff]
    %v44 = vld [vmem:[#allocation3 + $0x60] sm:$0xff]
    %v45 = vld [vmem:[#allocation3 + $0x68] sm:$0xff]
    %v46 = vld [vmem:[#allocation3 + $0x70] sm:$0xff]
    %v47 = vld [vmem:[#allocation3 + $0x78] sm:$0xff]
    %v48 = vld [vmem:[%s1] sm:$0x1]
    %v50 = vperm.slane %v48, 0
    %v52 = vmul.f32 %v32, %v50
    %v53 = vmul.f32 %v33, %v50
    %v54 = vmul.f32 %v34, %v50
    %v55 = vmul.f32 %v35, %v50
    %v56 = vmul.f32 %v36, %v50
    %v57 = vmul.f32 %v37, %v50
    %v58 = vmul.f32 %v38, %v50
    %v59 = vmul.f32 %v39, %v50
    %v60 = vmul.f32 %v40, %v50
    %v61 = vmul.f32 %v41, %v50
    %v62 = vmul.f32 %v42, %v50
    %v63 = vmul.f32 %v43, %v50
    %v64 = vmul.f32 %v44, %v50
    %v65 = vmul.f32 %v45, %v50
    %v66 = vmul.f32 %v46, %v50
    %v67 = vmul.f32 %v47, %v50
    %vm68 = vcmask 261120
    %v69 = vsel %vm68, %v52, 0.0
    %70 = vadd.xlane.f32.xlu0 %v69
    %v71 = vpop.xlane.xlu0 %70
    %v72 = vsel %vm68, %v53, 0.0
    %73 = vadd.xlane.f32.xlu0 %v72
    %v74 = vpop.xlane.xlu0 %73
    %v75 = vsel %vm68, %v54, 0.0
    %76 = vadd.xlane.f32.xlu0 %v75
    %v77 = vpop.xlane.xlu0 %76
    %v78 = vsel %vm68, %v55, 0.0
    %79 = vadd.xlane.f32.xlu0 %v78
    %v80 = vpop.xlane.xlu0 %79
    %v81 = vsel %vm68, %v56, 0.0
    %82 = vadd.xlane.f32.xlu0 %v81
    %v83 = vpop.xlane.xlu0 %82
    %v84 = vsel %vm68, %v57, 0.0
    %85 = vadd.xlane.f32.xlu0 %v84
    %v86 = vpop.xlane.xlu0 %85
    %v87 = vsel %vm68, %v58, 0.0
    %88 = vadd.xlane.f32.xlu0 %v87
    %v89 = vpop.xlane.xlu0 %88
    %v90 = vsel %vm68, %v59, 0.0
    %91 = vadd.xlane.f32.xlu0 %v90
    %v92 = vpop.xlane.xlu0 %91
    %v93 = vsel %vm68, %v60, 0.0
    %94 = vadd.xlane.f32.xlu0 %v93
    %v95 = vpop.xlane.xlu0 %94
    %v96 = vsel %vm68, %v61, 0.0
    %97 = vadd.xlane.f32.xlu0 %v96
    %v98 = vpop.xlane.xlu0 %97
    %v99 = vsel %vm68, %v62, 0.0
    %100 = vadd.xlane.f32.xlu0 %v99
    %v101 = vpop.xlane.xlu0 %100
    %v102 = vsel %vm68, %v63, 0.0
    %103 = vadd.xlane.f32.xlu0 %v102
    %v104 = vpop.xlane.xlu0 %103
    %v105 = vsel %vm68, %v64, 0.0
    %106 = vadd.xlane.f32.xlu0 %v105
    %v107 = vpop.xlane.xlu0 %106
    %v108 = vsel %vm68, %v65, 0.0
    %109 = vadd.xlane.f32.xlu0 %v108
    %v110 = vpop.xlane.xlu0 %109
    %v111 = vsel %vm68, %v66, 0.0
    %112 = vadd.xlane.f32.xlu0 %v111
    %v113 = vpop.xlane.xlu0 %112
    %v114 = vsel %vm68, %v67, 0.0
    %115 = vadd.xlane.f32.xlu0 %v114
    %v116 = vpop.xlane.xlu0 %115
    %s117 = sld [smem:[#allocation2]]
    %v118 = vstv %s117
    %v119 = vadd.f32 %v71, %v118
    %v120 = vadd.f32 %v74, %v118
    %v121 = vadd.f32 %v77, %v118
    %v122 = vadd.f32 %v80, %v118
    %v123 = vadd.f32 %v83, %v118
    %v124 = vadd.f32 %v86, %v118
    %v125 = vadd.f32 %v89, %v118
    %v126 = vadd.f32 %v92, %v118
    %v127 = vadd.f32 %v95, %v118
    %v128 = vadd.f32 %v98, %v118
    %v129 = vadd.f32 %v101, %v118
    %v130 = vadd.f32 %v104, %v118
    %v131 = vadd.f32 %v107, %v118
    %v132 = vadd.f32 %v110, %v118
    %v133 = vadd.f32 %v113, %v118
    %v134 = vadd.f32 %v116, %v118
    %v135 = vxor.u32 %v119, 2147483648
    %v136 = vxor.u32 %v120, 2147483648
    %v137 = vxor.u32 %v121, 2147483648
    %v138 = vxor.u32 %v122, 2147483648
    %v139 = vxor.u32 %v123, 2147483648
    %v140 = vxor.u32 %v124, 2147483648
    %v141 = vxor.u32 %v125, 2147483648
    %v142 = vxor.u32 %v126, 2147483648
    %v143 = vxor.u32 %v127, 2147483648
    %v144 = vxor.u32 %v128, 2147483648
    %v145 = vxor.u32 %v129, 2147483648
    %v146 = vxor.u32 %v130, 2147483648
    %v147 = vxor.u32 %v131, 2147483648
    %v148 = vxor.u32 %v132, 2147483648
    %v149 = vxor.u32 %v133, 2147483648
    %v150 = vxor.u32 %v134, 2147483648
    %v151 = vmul.f32 %v135, 1.442695
    %v152 = vpow.pop %v151
    %v153 = vmul.f32 %v136, 1.442695
    %v154 = vpow.pop %v153
    %v155 = vmul.f32 %v137, 1.442695
    %v156 = vpow.pop %v155
    %v157 = vmul.f32 %v138, 1.442695
    %v158 = vpow.pop %v157
    %v159 = vmul.f32 %v139, 1.442695
    %v160 = vpow.pop %v159
    %v161 = vmul.f32 %v140, 1.442695
    %v162 = vpow.pop %v161
    %v163 = vmul.f32 %v141, 1.442695
    %v164 = vpow.pop %v163
    %v165 = vmul.f32 %v142, 1.442695
    %v166 = vpow.pop %v165
    %v167 = vmul.f32 %v143, 1.442695
    %v168 = vpow.pop %v167
    %v169 = vmul.f32 %v144, 1.442695
    %v170 = vpow.pop %v169
    %v171 = vmul.f32 %v145, 1.442695
    %v172 = vpow.pop %v171
    %v173 = vmul.f32 %v146, 1.442695
    %v174 = vpow.pop %v173
    %v175 = vmul.f32 %v147, 1.442695
    %v176 = vpow.pop %v175
    %v177 = vmul.f32 %v148, 1.442695
    %v178 = vpow.pop %v177
    %v179 = vmul.f32 %v149, 1.442695
    %v180 = vpow.pop %v179
    %v181 = vmul.f32 %v150, 1.442695
    %v182 = vpow.pop %v181
    %v183 = vadd.f32 %v152, 1.0
    %v184 = vadd.f32 %v154, 1.0
    %v185 = vadd.f32 %v156, 1.0
    %v186 = vadd.f32 %v158, 1.0
    %v187 = vadd.f32 %v160, 1.0
    %v188 = vadd.f32 %v162, 1.0
    %v189 = vadd.f32 %v164, 1.0
    %v190 = vadd.f32 %v166, 1.0
    %v191 = vadd.f32 %v168, 1.0
    %v192 = vadd.f32 %v170, 1.0
    %v193 = vadd.f32 %v172, 1.0
    %v194 = vadd.f32 %v174, 1.0
    %v195 = vadd.f32 %v176, 1.0
    %v196 = vadd.f32 %v178, 1.0
    %v197 = vadd.f32 %v180, 1.0
    %v198 = vadd.f32 %v182, 1.0
    %v199 = vrcp.pop %v183
    %v200 = vmul.f32 %v183, %v199
    %v201 = vsub.f32 1.0, %v200
    %v202 = vmul.f32 %v199, %v201
    %v203 = vadd.f32 %v199, %v202
    %vm204 = vweird.f32 %v183
    %vm205 = vweird.f32 %v199
    %vm206 = vmor %vm204, %vm205
    %v207 = vsel %vm206, %v199, %v203
    %v208 = vand.u32 2147483647, %v183
    %vm209 = vcmp.eq.f32.partialorder %v208, 8.507059e+37
    %v210 = vand.u32 %v183, 2147483648
    %v211 = vor.u32 1.1754944e-38, %v210
    %v212 = vsel %vm209, %v211, %v207
    %v213 = vmul.f32 1.0, %v212
    %v214 = vrcp.pop %v184
    %v215 = vmul.f32 %v184, %v214
    %v216 = vsub.f32 1.0, %v215
    %v217 = vmul.f32 %v214, %v216
    %v218 = vadd.f32 %v214, %v217
    %vm219 = vweird.f32 %v184
    %vm220 = vweird.f32 %v214
    %vm221 = vmor %vm219, %vm220
    %v222 = vsel %vm221, %v214, %v218
    %v223 = vand.u32 2147483647, %v184
    %vm224 = vcmp.eq.f32.partialorder %v223, 8.507059e+37
    %v225 = vand.u32 %v184, 2147483648
    %v226 = vor.u32 1.1754944e-38, %v225
    %v227 = vsel %vm224, %v226, %v222
    %v228 = vmul.f32 1.0, %v227
    %v229 = vrcp.pop %v185
    %v230 = vmul.f32 %v185, %v229
    %v231 = vsub.f32 1.0, %v230
    %v232 = vmul.f32 %v229, %v231
    %v233 = vadd.f32 %v229, %v232
    %vm234 = vweird.f32 %v185
    %vm235 = vweird.f32 %v229
    %vm236 = vmor %vm234, %vm235
    %v237 = vsel %vm236, %v229, %v233
    %v238 = vand.u32 2147483647, %v185
    %vm239 = vcmp.eq.f32.partialorder %v238, 8.507059e+37
    %v240 = vand.u32 %v185, 2147483648
    %v241 = vor.u32 1.1754944e-38, %v240
    %v242 = vsel %vm239, %v241, %v237
    %v243 = vmul.f32 1.0, %v242
    %v244 = vrcp.pop %v186
    %v245 = vmul.f32 %v186, %v244
    %v246 = vsub.f32 1.0, %v245
    %v247 = vmul.f32 %v244, %v246
    %v248 = vadd.f32 %v244, %v247
    %vm249 = vweird.f32 %v186
    %vm250 = vweird.f32 %v244
    %vm251 = vmor %vm249, %vm250
    %v252 = vsel %vm251, %v244, %v248
    %v253 = vand.u32 2147483647, %v186
    %vm254 = vcmp.eq.f32.partialorder %v253, 8.507059e+37
    %v255 = vand.u32 %v186, 2147483648
    %v256 = vor.u32 1.1754944e-38, %v255
    %v257 = vsel %vm254, %v256, %v252
    %v258 = vmul.f32 1.0, %v257
    %v259 = vrcp.pop %v187
    %v260 = vmul.f32 %v187, %v259
    %v261 = vsub.f32 1.0, %v260
    %v262 = vmul.f32 %v259, %v261
    %v263 = vadd.f32 %v259, %v262
    %vm264 = vweird.f32 %v187
    %vm265 = vweird.f32 %v259
    %vm266 = vmor %vm264, %vm265
    %v267 = vsel %vm266, %v259, %v263
    %v268 = vand.u32 2147483647, %v187
    %vm269 = vcmp.eq.f32.partialorder %v268, 8.507059e+37
    %v270 = vand.u32 %v187, 2147483648
    %v271 = vor.u32 1.1754944e-38, %v270
    %v272 = vsel %vm269, %v271, %v267
    %v273 = vmul.f32 1.0, %v272
    %v274 = vrcp.pop %v188
    %v275 = vmul.f32 %v188, %v274
    %v276 = vsub.f32 1.0, %v275
    %v277 = vmul.f32 %v274, %v276
    %v278 = vadd.f32 %v274, %v277
    %vm279 = vweird.f32 %v188
    %vm280 = vweird.f32 %v274
    %vm281 = vmor %vm279, %vm280
    %v282 = vsel %vm281, %v274, %v278
    %v283 = vand.u32 2147483647, %v188
    %vm284 = vcmp.eq.f32.partialorder %v283, 8.507059e+37
    %v285 = vand.u32 %v188, 2147483648
    %v286 = vor.u32 1.1754944e-38, %v285
    %v287 = vsel %vm284, %v286, %v282
    %v288 = vmul.f32 1.0, %v287
    %v289 = vrcp.pop %v189
    %v290 = vmul.f32 %v189, %v289
    %v291 = vsub.f32 1.0, %v290
    %v292 = vmul.f32 %v289, %v291
    %v293 = vadd.f32 %v289, %v292
    %vm294 = vweird.f32 %v189
    %vm295 = vweird.f32 %v289
    %vm296 = vmor %vm294, %vm295
    %v297 = vsel %vm296, %v289, %v293
    %v298 = vand.u32 2147483647, %v189
    %vm299 = vcmp.eq.f32.partialorder %v298, 8.507059e+37
    %v300 = vand.u32 %v189, 2147483648
    %v301 = vor.u32 1.1754944e-38, %v300
    %v302 = vsel %vm299, %v301, %v297
    %v303 = vmul.f32 1.0, %v302
    %v304 = vrcp.pop %v190
    %v305 = vmul.f32 %v190, %v304
    %v306 = vsub.f32 1.0, %v305
    %v307 = vmul.f32 %v304, %v306
    %v308 = vadd.f32 %v304, %v307
    %vm309 = vweird.f32 %v190
    %vm310 = vweird.f32 %v304
    %vm311 = vmor %vm309, %vm310
    %v312 = vsel %vm311, %v304, %v308
    %v313 = vand.u32 2147483647, %v190
    %vm314 = vcmp.eq.f32.partialorder %v313, 8.507059e+37
    %v315 = vand.u32 %v190, 2147483648
    %v316 = vor.u32 1.1754944e-38, %v315
    %v317 = vsel %vm314, %v316, %v312
    %v318 = vmul.f32 1.0, %v317
    %v319 = vrcp.pop %v191
    %v320 = vmul.f32 %v191, %v319
    %v321 = vsub.f32 1.0, %v320
    %v322 = vmul.f32 %v319, %v321
    %v323 = vadd.f32 %v319, %v322
    %vm324 = vweird.f32 %v191
    %vm325 = vweird.f32 %v319
    %vm326 = vmor %vm324, %vm325
    %v327 = vsel %vm326, %v319, %v323
    %v328 = vand.u32 2147483647, %v191
    %vm329 = vcmp.eq.f32.partialorder %v328, 8.507059e+37
    %v330 = vand.u32 %v191, 2147483648
    %v331 = vor.u32 1.1754944e-38, %v330
    %v332 = vsel %vm329, %v331, %v327
    %v333 = vmul.f32 1.0, %v332
    %v334 = vrcp.pop %v192
    %v335 = vmul.f32 %v192, %v334
    %v336 = vsub.f32 1.0, %v335
    %v337 = vmul.f32 %v334, %v336
    %v338 = vadd.f32 %v334, %v337
    %vm339 = vweird.f32 %v192
    %vm340 = vweird.f32 %v334
    %vm341 = vmor %vm339, %vm340
    %v342 = vsel %vm341, %v334, %v338
    %v343 = vand.u32 2147483647, %v192
    %vm344 = vcmp.eq.f32.partialorder %v343, 8.507059e+37
    %v345 = vand.u32 %v192, 2147483648
    %v346 = vor.u32 1.1754944e-38, %v345
    %v347 = vsel %vm344, %v346, %v342
    %v348 = vmul.f32 1.0, %v347
    %v349 = vrcp.pop %v193
    %v350 = vmul.f32 %v193, %v349
    %v351 = vsub.f32 1.0, %v350
    %v352 = vmul.f32 %v349, %v351
    %v353 = vadd.f32 %v349, %v352
    %vm354 = vweird.f32 %v193
    %vm355 = vweird.f32 %v349
    %vm356 = vmor %vm354, %vm355
    %v357 = vsel %vm356, %v349, %v353
    %v358 = vand.u32 2147483647, %v193
    %vm359 = vcmp.eq.f32.partialorder %v358, 8.507059e+37
    %v360 = vand.u32 %v193, 2147483648
    %v361 = vor.u32 1.1754944e-38, %v360
    %v362 = vsel %vm359, %v361, %v357
    %v363 = vmul.f32 1.0, %v362
    %v364 = vrcp.pop %v194
    %v365 = vmul.f32 %v194, %v364
    %v366 = vsub.f32 1.0, %v365
    %v367 = vmul.f32 %v364, %v366
    %v368 = vadd.f32 %v364, %v367
    %vm369 = vweird.f32 %v194
    %vm370 = vweird.f32 %v364
    %vm371 = vmor %vm369, %vm370
    %v372 = vsel %vm371, %v364, %v368
    %v373 = vand.u32 2147483647, %v194
    %vm374 = vcmp.eq.f32.partialorder %v373, 8.507059e+37
    %v375 = vand.u32 %v194, 2147483648
    %v376 = vor.u32 1.1754944e-38, %v375
    %v377 = vsel %vm374, %v376, %v372
    %v378 = vmul.f32 1.0, %v377
    %v379 = vrcp.pop %v195
    %v380 = vmul.f32 %v195, %v379
    %v381 = vsub.f32 1.0, %v380
    %v382 = vmul.f32 %v379, %v381
    %v383 = vadd.f32 %v379, %v382
    %vm384 = vweird.f32 %v195
    %vm385 = vweird.f32 %v379
    %vm386 = vmor %vm384, %vm385
    %v387 = vsel %vm386, %v379, %v383
    %v388 = vand.u32 2147483647, %v195
    %vm389 = vcmp.eq.f32.partialorder %v388, 8.507059e+37
    %v390 = vand.u32 %v195, 2147483648
    %v391 = vor.u32 1.1754944e-38, %v390
    %v392 = vsel %vm389, %v391, %v387
    %v393 = vmul.f32 1.0, %v392
    %v394 = vrcp.pop %v196
    %v395 = vmul.f32 %v196, %v394
    %v396 = vsub.f32 1.0, %v395
    %v397 = vmul.f32 %v394, %v396
    %v398 = vadd.f32 %v394, %v397
    %vm399 = vweird.f32 %v196
    %vm400 = vweird.f32 %v394
    %vm401 = vmor %vm399, %vm400
    %v402 = vsel %vm401, %v394, %v398
    %v403 = vand.u32 2147483647, %v196
    %vm404 = vcmp.eq.f32.partialorder %v403, 8.507059e+37
    %v405 = vand.u32 %v196, 2147483648
    %v406 = vor.u32 1.1754944e-38, %v405
    %v407 = vsel %vm404, %v406, %v402
    %v408 = vmul.f32 1.0, %v407
    %v409 = vrcp.pop %v197
    %v410 = vmul.f32 %v197, %v409
    %v411 = vsub.f32 1.0, %v410
    %v412 = vmul.f32 %v409, %v411
    %v413 = vadd.f32 %v409, %v412
    %vm414 = vweird.f32 %v197
    %vm415 = vweird.f32 %v409
    %vm416 = vmor %vm414, %vm415
    %v417 = vsel %vm416, %v409, %v413
    %v418 = vand.u32 2147483647, %v197
    %vm419 = vcmp.eq.f32.partialorder %v418, 8.507059e+37
    %v420 = vand.u32 %v197, 2147483648
    %v421 = vor.u32 1.1754944e-38, %v420
    %v422 = vsel %vm419, %v421, %v417
    %v423 = vmul.f32 1.0, %v422
    %v424 = vrcp.pop %v198
    %v425 = vmul.f32 %v198, %v424
    %v426 = vsub.f32 1.0, %v425
    %v427 = vmul.f32 %v424, %v426
    %v428 = vadd.f32 %v424, %v427
    %vm429 = vweird.f32 %v198
    %vm430 = vweird.f32 %v424
    %vm431 = vmor %vm429, %vm430
    %v432 = vsel %vm431, %v424, %v428
    %v433 = vand.u32 2147483647, %v198
    %vm434 = vcmp.eq.f32.partialorder %v433, 8.507059e+37
    %v435 = vand.u32 %v198, 2147483648
    %v436 = vor.u32 1.1754944e-38, %v435
    %v437 = vsel %vm434, %v436, %v432
    %v438 = vmul.f32 1.0, %v437
    %v455 = vlaneseq
    %v456 = vand.u32 %v455, 127
    %v457 = vperm.slane %v213, %v456
    %v458 = vadd.s32 %v456, 4294967288
    %v459 = vperm.slane %v228, %v458
    %vm460 = vcmask 130112
    %v461 = vsel %vm460, %v459, %v457
    %v462 = vadd.s32 %v456, 4294967280
    %v463 = vperm.slane %v243, %v462
    %vm464 = vcmask 195712
    %v465 = vsel %vm464, %v463, %v461
    %v466 = vadd.s32 %v456, 4294967272
    %v467 = vperm.slane %v258, %v466
    %vm468 = vcmask 261312
    %v469 = vsel %vm468, %v467, %v465
    %v470 = vadd.s32 %v456, 4294967264
    %v471 = vperm.slane %v273, %v470
    %vm472 = vcmask 326912
    %v473 = vsel %vm472, %v471, %v469
    %v474 = vadd.s32 %v456, 4294967256
    %v475 = vperm.slane %v288, %v474
    %vm476 = vcmask 392512
    %v477 = vsel %vm476, %v475, %v473
    %v478 = vadd.s32 %v456, 4294967248
    %v479 = vperm.slane %v303, %v478
    %vm480 = vcmask 458112
    %v481 = vsel %vm480, %v479, %v477
    %v482 = vadd.s32 %v456, 4294967240
    %v483 = vperm.slane %v318, %v482
    %vm484 = vcmask 523712
    %v485 = vsel %vm484, %v483, %v481
    %v486 = vadd.s32 %v456, 4294967232
    %v487 = vperm.slane %v333, %v486
    %vm488 = vcmask 589312
    %v489 = vsel %vm488, %v487, %v485
    %v490 = vadd.s32 %v456, 4294967224
    %v491 = vperm.slane %v348, %v490
    %vm492 = vcmask 654912
    %v493 = vsel %vm492, %v491, %v489
    %v494 = vadd.s32 %v456, 4294967216
    %v495 = vperm.slane %v363, %v494
    %vm496 = vcmask 720512
    %v497 = vsel %vm496, %v495, %v493
    %v498 = vadd.s32 %v456, 4294967208
    %v499 = vperm.slane %v378, %v498
    %vm500 = vcmask 786112
    %v501 = vsel %vm500, %v499, %v497
    %v502 = vadd.s32 %v456, 4294967200
    %v503 = vperm.slane %v393, %v502
    %vm504 = vcmask 851712
    %v505 = vsel %vm504, %v503, %v501
    %v506 = vadd.s32 %v456, 4294967192
    %v507 = vperm.slane %v408, %v506
    %vm508 = vcmask 917312
    %v509 = vsel %vm508, %v507, %v505
    %v510 = vadd.s32 %v456, 4294967184
    %v511 = vperm.slane %v423, %v510
    %vm512 = vcmask 982912
    %v513 = vsel %vm512, %v511, %v509
    %v514 = vadd.s32 %v456, 4294967176
    %v515 = vperm.slane %v438, %v514
    %vm516 = vcmask 1048512
    %v517 = vsel %vm516, %v515, %v513
    %519 = vst [vmem:[#allocation6] sm:$0x1] %v517
    // Predicated region
    $region18: #{tpu_custom_call.1} parent=1 // pred_check
      _
    $region19: #{tpu_custom_call.1} parent=1 // pred_check_branch
      %521 = sbr.rel (0) target = $region21
    $region20: #{tpu_custom_call.1} parent=1 // pred_region
      %523 = vsyncadd [#allocation5], 0
      %s525 = sshll.u32 [#allocation6], 4
      %s526 = int_to_ptr.vmem [resolvable:$true] %s525
      %s527 = sshll.u32 %s3, 4
      %s528 = int_to_ptr.hbm [resolvable:$true] %s527
      %530 = dma.vmem_to_hbm [thread:$0]  %s526, 16, %s528, [#allocation5]
    $region21: #{tpu_custom_call.1} parent=1 // pred_fallthru
      _
    // Predicated region
    $region22: #{tpu_custom_call.1} parent=1 // pred_check
      _
    $region23: #{tpu_custom_call.1} parent=1 // pred_check_branch
      %532 = sbr.rel (0) target = $region25
    $region24: #{tpu_custom_call.1} parent=1 // pred_region
      %534 = dma.done [#allocation5], 16
    $region25: #{tpu_custom_call.1} parent=1 // pred_fallthru
      _
    %535 = vsyncpa [#allocation4], 1
    %536 = vsyncpa [#allocation5], 1

</llo_original>
